<compile_context>
chip_gen: v6e
topology: v6e:2x2x1
jax: 0.10.0
libtpu: 0.0.40
codegen_flags: <defaults>
</compile_context>

<pallas_src>
import functools

import jax
import jax.numpy as jnp
import numpy as np
from jax.experimental import pallas as pl
from jax.experimental.pallas import tpu as pltpu

EPS = 1e-5


def _dla_node_kernel(w_ref, p_ref, g_ref, b_ref, o_ref, *, n_valid, n_lanes):
    """Fused conv(3x3 as im2col matmul) + BatchNorm(train) + ReLU, one shot.

    w_ref: (Cout, K)  bf16 folded conv weights, K = KH*KW*Cin
    p_ref: (K, Lp)    bf16 im2col patches, lane axis = flattened N*H*W (padded)
    g_ref: (Cout, 1)  f32 BN gamma
    b_ref: (Cout, 1)  f32 BN beta
    o_ref: (Cout, Lp) f32 output
    """
    # Conv as a single lane-dense MXU matmul, f32 accumulation.
    y = jnp.dot(w_ref[...], p_ref[...], preferred_element_type=jnp.float32)

    padded = n_lanes != n_valid
    if padded:
        valid = jax.lax.broadcasted_iota(jnp.int32, y.shape, 1) < n_valid

    inv_n = 1.0 / float(n_valid)

    # Per-channel batch mean over (N, H, W)  (padded columns excluded).
    y_stats = jnp.where(valid, y, 0.0) if padded else y
    mean = jnp.sum(y_stats, axis=1, keepdims=True) * inv_n        # (Cout, 1)

    # Two-pass biased variance on the resident y (no E[y^2]-E[y]^2 cancellation).
    centered = y - mean
    c_stats = jnp.where(valid, centered, 0.0) if padded else centered
    var = jnp.sum(c_stats * c_stats, axis=1, keepdims=True) * inv_n

    # BN affine + ReLU, coefficients computed once.
    scale = g_ref[...] * jax.lax.rsqrt(var + EPS)                 # (Cout, 1)
    o_ref[...] = jnp.maximum(centered * scale + b_ref[...], 0.0)


def dla_node_forward(x_nchw, w_oihw, conv_bias, gamma, beta):
    """Conv2d(3x3, pad=1) -> BatchNorm2d (training-mode fwd) -> ReLU.

    x_nchw: (N, Cin, H, W); w_oihw: (Cout, Cin, KH, KW). Returns NCHW f32.
    conv_bias is accepted for interface parity but unused: training-mode
    BatchNorm's mean subtraction cancels a per-channel conv bias exactly.
    """
    del conv_bias  # mathematically redundant under training-mode BatchNorm
    N, Cin, H, W = x_nchw.shape
    Cout, _, KH, KW = w_oihw.shape
    pad = 1
    L = N * H * W
    K = KH * KW * Cin
    Lp = ((L + 127) // 128) * 128   # lane-dense (multiple-of-128) padded length

    # --- im2col once on the XLA side: patches (K, Lp), lane axis = N*H*W ---
    # TODO(synk): for large H/W/Cin, build the 9 taps in-kernel from a halo'd
    # NHWC tile (memory_space=pl.ANY + make_async_copy) instead of
    # materializing the 9x-blown-up im2col matrix in HBM.
    x_nhwc = jnp.transpose(x_nchw, (0, 2, 3, 1)).astype(jnp.float32)
    x_pad = jnp.pad(x_nhwc, ((0, 0), (pad, pad), (pad, pad), (0, 0)))
    taps = [x_pad[:, kh:kh + H, kw:kw + W, :]
            for kh in range(KH) for kw in range(KW)]
    patches = jnp.stack(taps, axis=0)                      # (9, N, H, W, Cin)
    patches = jnp.transpose(patches, (0, 4, 1, 2, 3)).reshape(K, L)
    if Lp != L:
        patches = jnp.pad(patches, ((0, 0), (0, Lp - L)))
    patches = patches.astype(jnp.bfloat16)                 # halve HBM read

    # Folded weights (Cout, K), k = (kh*KW + kw)*Cin + cin  (matches patches).
    w2 = jnp.transpose(w_oihw, (0, 2, 3, 1)).reshape(Cout, K).astype(jnp.bfloat16)
    g = gamma.reshape(Cout, 1).astype(jnp.float32)
    b = beta.reshape(Cout, 1).astype(jnp.float32)

    # Single fused invocation (grid=()), whole problem resident in VMEM.
    out_flat = pl.pallas_call(
        functools.partial(_dla_node_kernel, n_valid=L, n_lanes=Lp),
        in_specs=[pl.BlockSpec(memory_space=pltpu.MemorySpace.VMEM)] * 4,
        out_specs=pl.BlockSpec(memory_space=pltpu.MemorySpace.VMEM),
        out_shape=jax.ShapeDtypeStruct((Cout, Lp), jnp.float32),
    )(w2, patches, g, b)

    if Lp != L:
        out_flat = out_flat[:, :L]
    # Back to PyTorch's NCHW layout.
    return jnp.transpose(out_flat.reshape(Cout, N, H, W), (1, 0, 2, 3))


def _reference(x_nchw, w_oihw, conv_bias, gamma, beta):
    y = jax.lax.conv_general_dilated(
        x_nchw, w_oihw, window_strides=(1, 1),
        padding=((1, 1), (1, 1)),
        dimension_numbers=("NCHW", "OIHW", "NCHW"))
    y = y + conv_bias[None, :, None, None]
    mean = jnp.mean(y, axis=(0, 2, 3), keepdims=True)
    var = jnp.mean((y - mean) ** 2, axis=(0, 2, 3), keepdims=True)
    y = (y - mean) / jnp.sqrt(var + EPS)
    y = y * gamma[None, :, None, None] + beta[None, :, None, None]
    return jnp.maximum(y, 0.0)


if __name__ == "__main__":
    # Small shapes consistent with the module: in_planes=4, out_planes=8, 16x16.
    N, Cin, Cout, H, W = 2, 4, 8, 16, 16
    KH = KW = 3

    key = jax.random.PRNGKey(0)
    kx, kw, kb, kg, kbe = jax.random.split(key, 5)

    x = jax.random.normal(kx, (N, Cin, H, W), dtype=jnp.float32)
    fan_in = Cin * KH * KW
    w_conv = jax.random.uniform(kw, (Cout, Cin, KH, KW), dtype=jnp.float32,
                                minval=-1.0, maxval=1.0) / jnp.sqrt(fan_in)
    b_conv = jax.random.uniform(kb, (Cout,), dtype=jnp.float32,
                                minval=-1.0, maxval=1.0) / jnp.sqrt(fan_in)
    gamma = 1.0 + 0.1 * jax.random.normal(kg, (Cout,), dtype=jnp.float32)
    beta = 0.1 * jax.random.normal(kbe, (Cout,), dtype=jnp.float32)

    fwd = jax.jit(dla_node_forward)
    out = jax.block_until_ready(fwd(x, w_conv, b_conv, gamma, beta))

    ref = jax.block_until_ready(_reference(x, w_conv, b_conv, gamma, beta))
    # bf16 matmul operands (f32 accumulation) => relax tolerance accordingly.
    np.testing.assert_allclose(np.asarray(out), np.asarray(ref),
                               atol=3e-2, rtol=3e-2)

    print("KERNEL_OK")
</pallas_src>

<mosaic_0001>
module attributes {stable_mosaic.version = 11 : i64} {
  func.func @_dla_node_kernel(%arg0: memref<8x36xbf16, #tpu.memory_space<vmem>>, %arg1: memref<36x512xbf16, #tpu.memory_space<vmem>>, %arg2: memref<8x1xf32, #tpu.memory_space<vmem>>, %arg3: memref<8x1xf32, #tpu.memory_space<vmem>>, %arg4: memref<8x512xf32, #tpu.memory_space<vmem>>) attributes {dimension_semantics = [], scalar_prefetch = 0 : i64, scratch_operands = 0 : i64, tpu.core_type = #tpu.core_type<tc>} {
    %c0 = arith.constant 0 : index
    %c0_0 = arith.constant 0 : index
    %0 = vector.load %arg0[%c0, %c0_0] : memref<8x36xbf16, #tpu.memory_space<vmem>>, vector<8x36xbf16>
    %c0_1 = arith.constant 0 : index
    %c0_2 = arith.constant 0 : index
    %1 = vector.load %arg1[%c0_1, %c0_2] : memref<36x512xbf16, #tpu.memory_space<vmem>>, vector<36x512xbf16>
    %cst = arith.constant dense<0.000000e+00> : vector<8x512xf32>
    %2 = tpu.matmul %0, %1, %cst {dimension_numbers = #tpu.dot_dimension_numbers<[1], [0], [0], [1], [0, 0, 1, 1], [], []>} : vector<8x36xbf16>, vector<36x512xbf16>, vector<8x512xf32> -> vector<8x512xf32>
    %cst_3 = arith.constant dense<0.000000e+00> : vector<8xf32>
    %3 = vector.multi_reduction <add>, %2, %cst_3 [1] : vector<8x512xf32> to vector<8xf32>
    %4 = vector.shape_cast %3 : vector<8xf32> to vector<8x1xf32>
    %cst_4 = arith.constant 0.001953125 : f32
    %5 = vector.broadcast %cst_4 : f32 to vector<8x1xf32>
    %6 = arith.mulf %4, %5 : vector<8x1xf32>
    %7 = vector.broadcast %6 : vector<8x1xf32> to vector<8x512xf32>
    %8 = arith.subf %2, %7 : vector<8x512xf32>
    %9 = arith.mulf %8, %8 : vector<8x512xf32>
    %cst_5 = arith.constant dense<0.000000e+00> : vector<8xf32>
    %10 = vector.multi_reduction <add>, %9, %cst_5 [1] : vector<8x512xf32> to vector<8xf32>
    %11 = vector.shape_cast %10 : vector<8xf32> to vector<8x1xf32>
    %cst_6 = arith.constant 0.001953125 : f32
    %12 = vector.broadcast %cst_6 : f32 to vector<8x1xf32>
    %13 = arith.mulf %11, %12 : vector<8x1xf32>
    %c0_7 = arith.constant 0 : index
    %c0_8 = arith.constant 0 : index
    %14 = vector.load %arg2[%c0_7, %c0_8] : memref<8x1xf32, #tpu.memory_space<vmem>>, vector<8x1xf32>
    %cst_9 = arith.constant 9.99999974E-6 : f32
    %15 = vector.broadcast %cst_9 : f32 to vector<8x1xf32>
    %16 = arith.addf %13, %15 : vector<8x1xf32>
    %17 = math.rsqrt %16 : vector<8x1xf32>
    %18 = arith.mulf %14, %17 : vector<8x1xf32>
    %19 = vector.broadcast %18 : vector<8x1xf32> to vector<8x512xf32>
    %20 = arith.mulf %8, %19 : vector<8x512xf32>
    %c0_10 = arith.constant 0 : index
    %c0_11 = arith.constant 0 : index
    %21 = vector.load %arg3[%c0_10, %c0_11] : memref<8x1xf32, #tpu.memory_space<vmem>>, vector<8x1xf32>
    %22 = vector.broadcast %21 : vector<8x1xf32> to vector<8x512xf32>
    %23 = arith.addf %20, %22 : vector<8x512xf32>
    %cst_12 = arith.constant 0.000000e+00 : f32
    %24 = vector.broadcast %cst_12 : f32 to vector<8x512xf32>
    %25 = arith.maximumf %23, %24 : vector<8x512xf32>
    %c0_13 = arith.constant 0 : index
    %c0_14 = arith.constant 0 : index
    %26 = vector.load %arg4[%c0_13, %c0_14] : memref<8x512xf32, #tpu.memory_space<vmem>>, vector<8x512xf32>
    tpu.vector_store %arg4[%c0_13, %c0_14], %25 {strides = array<i32>} : memref<8x512xf32, #tpu.memory_space<vmem>>, vector<8x512xf32>,
    return
  }
}

</mosaic_0001>

<llo_original>
// kernel: dla_node_forward.1
$region0: #{dla_node_forward.1}
  #allocation0 [shape = 'u32[]', space=smem, size = 0x4, offset = 0x4, fixed_abs, tag = 'smem constant byte address 0x4 - core index']
  #allocation1 [shape = 'u32[144,128]{1,0:T(1,128)}', space=vmem, size = 0x12000, scoped, tag = 'internal scratch']
  %s0 = inlined_call_operand.vmem [shape: bf16[8,36], index: 0, kind: input, shape index: {}]
  %s1 = inlined_call_operand.vmem [shape: bf16[36,512], index: 1, kind: input, shape index: {}]
  %s2 = inlined_call_operand.vmem [shape: f32[8,1], index: 2, kind: input, shape index: {}]
  %s3 = inlined_call_operand.vmem [shape: f32[8,1], index: 3, kind: input, shape index: {}]
  %s4 = inlined_call_operand.vmem [shape: f32[8,512], index: 4, kind: output, shape index: {}]
  %s5 = sld [smem:[#allocation0]]
  $region26: #{dla_node_forward.1} parent=0
    _
  %s7 = ssub.s32 1, %s5
  %s8 = scalar_select 0, %s7, %s5
  // Predicated region
  $region2: #{dla_node_forward.1} parent=0 // pred_check
    _
  $region3: #{dla_node_forward.1} parent=0 // pred_check_branch
    %10 = sbr.rel (0) target = $region5
  $region4: #{dla_node_forward.1} parent=0 // pred_region
    _
  $region5: #{dla_node_forward.1} parent=0 // pred_fallthru
    _
  // Predicated region
  $region6: #{dla_node_forward.1} parent=0 // pred_check
    _
  $region7: #{dla_node_forward.1} parent=0 // pred_check_branch
    %12 = sbr.rel (0) target = $region9
  $region8: #{dla_node_forward.1} parent=0 // pred_region
    _
  $region9: #{dla_node_forward.1} parent=0 // pred_fallthru
    _
  // Predicated region
  $region10: #{dla_node_forward.1} parent=0 // pred_check
    _
  $region11: #{dla_node_forward.1} parent=0 // pred_check_branch
    %14 = sbr.rel (0) target = $region13
  $region12: #{dla_node_forward.1} parent=0 // pred_region
    _
  $region13: #{dla_node_forward.1} parent=0 // pred_fallthru
    _
  // Predicated region
  $region14: #{dla_node_forward.1} parent=0 // pred_check
    _
  $region15: #{dla_node_forward.1} parent=0 // pred_check_branch
    %16 = sbr.rel (0) target = $region17
  $region16: #{dla_node_forward.1} parent=0 // pred_region
    _
  $region17: #{dla_node_forward.1} parent=0 // pred_fallthru
    _
  %v18 = vld [vmem:[%s0] sm:$0xf]
  %v19 = vld [vmem:[%s1] sm:$0xff]
  %v20 = vld [vmem:[%s1 + $0x8] sm:$0xff]
  %v21 = vld [vmem:[%s1 + $0x10] sm:$0xff]
  %v22 = vld [vmem:[%s1 + $0x18] sm:$0xff]
  %v23 = vld [vmem:[%s1 + $0x20] sm:$0xff]
  %v24 = vld [vmem:[%s1 + $0x28] sm:$0xff]
  %v25 = vld [vmem:[%s1 + $0x30] sm:$0xff]
  %v26 = vld [vmem:[%s1 + $0x38] sm:$0xff]
  %v27 = vld [vmem:[%s1 + $0x40] sm:$0x33]
  %v28 = vld [vmem:[%s1 + $0x48] sm:$0x33]
  %v39 = vunpack.c.l.b16 %v19
  %v40 = vunpack.c.h.b16 %v19
  %v41 = vunpack.c.l.b16 %v20
  %v42 = vunpack.c.h.b16 %v20
  %v43 = vunpack.c.l.b16 %v21
  %v44 = vunpack.c.h.b16 %v21
  %v45 = vunpack.c.l.b16 %v22
  %v46 = vunpack.c.h.b16 %v22
  %v47 = vunpack.c.l.b16 %v23
  %v48 = vunpack.c.h.b16 %v23
  %v49 = vunpack.c.l.b16 %v24
  %v50 = vunpack.c.h.b16 %v24
  %v51 = vunpack.c.l.b16 %v25
  %v52 = vunpack.c.h.b16 %v25
  %v53 = vunpack.c.l.b16 %v26
  %v54 = vunpack.c.h.b16 %v26
  %v55 = vunpack.c.l.b16 %v27
  %v56 = vunpack.c.h.b16 %v27
  %v57 = vunpack.c.l.b16 %v28
  %v58 = vunpack.c.h.b16 %v28
  %v59 = vpack.c.b16 %v43, %v39
  %v60 = vpack.c.b16 %v44, %v40
  %v61 = vpack.c.b16 %v45, %v41
  %v62 = vpack.c.b16 %v46, %v42
  %v63 = vpack.c.b16 %v51, %v47
  %v64 = vpack.c.b16 %v52, %v48
  %v65 = vpack.c.b16 %v53, %v49
  %v66 = vpack.c.b16 %v54, %v50
  %v67 = vpack.c.b16 %v55, %v55
  %v68 = vpack.c.b16 %v56, %v56
  %v69 = vpack.c.b16 %v57, %v57
  %v70 = vpack.c.b16 %v58, %v58
  %vm79 = vcmask 293888
  %v81 = vsel %vm79, %v18, 0
  %vm83 = vcmask 1041408
  %v85 = vsel %vm83, %v67, 0
  %v88 = vsel %vm83, %v68, 0
  %v91 = vsel %vm83, %v69, 0
  %v94 = vsel %vm83, %v70, 0
  %96 = vmatprep.subr.bf16.mxu0 0
  %97 = vmatpush1.bf16.msra.mxu0 0
  %98 = vmatprep.subr.bf16.mxu0 0
  %99 = vmatpush1.bf16.msra.mxu0 0
  %100 = vmatprep.subr.bf16.mxu0 0
  %101 = vmatpush1.bf16.msra.mxu0 0
  %102 = vmatprep.subr.bf16.mxu0 0
  %103 = vmatpush1.bf16.msra.mxu0 0
  %104 = vmatprep.subr.bf16.mxu0 0
  %105 = vmatpush1.bf16.msra.mxu0 0
  %106 = vmatprep.subr.bf16.mxu0 %v88
  %107 = vmatpush1.bf16.msra.mxu0 %v85
  %108 = vmatprep.subr.bf16.mxu0 %v64
  %109 = vmatpush1.bf16.msra.mxu0 %v63
  %110 = vmatprep.subr.bf16.mxu0 %v60
  %111 = vmatpush1.bf16.msra.mxu0 %v59
  %112 = vmatprep.subr.bf16.mxu0 0
  %113 = vmatpush2.bf16.msra.mxu0 0
  %114 = vmatprep.subr.bf16.mxu0 0
  %115 = vmatpush2.bf16.msra.mxu0 0
  %116 = vmatprep.subr.bf16.mxu0 0
  %117 = vmatpush2.bf16.msra.mxu0 0
  %118 = vmatprep.subr.bf16.mxu0 0
  %119 = vmatpush2.bf16.msra.mxu0 0
  %120 = vmatprep.subr.bf16.mxu0 0
  %121 = vmatpush2.bf16.msra.mxu0 0
  %122 = vmatprep.subr.bf16.mxu0 0
  %123 = vmatpush2.bf16.msra.mxu0 0
  %124 = vmatprep.subr.bf16.mxu0 0
  %125 = vmatpush2.bf16.msra.mxu0 0
  %126 = vmatprep.subr.bf16.mxu0 0
  %127 = vmatpush2.bf16.msra.mxu0 0
  %128 = vmatprep.mubr.bf16.mxu0 0
  %129 = vmatmul.mubr.bf16.gmra.mxu0 %v81
  %v130 = vpop.f32.mrf.mxu0
  %v131 = vadd.f32 0.0, %v130
  %v132 = vpop.f32.mrf.mxu0
  %v133 = vadd.f32 0.0, %v132
  %v134 = vpop.f32.mrf.mxu0
  %v135 = vpop.f32.mrf.mxu0
  %136 = vdwg.mxu0
  %137 = vmatprep.subr.bf16.mxu0 0
  %138 = vmatpush1.bf16.msra.mxu0 0
  %139 = vmatprep.subr.bf16.mxu0 0
  %140 = vmatpush1.bf16.msra.mxu0 0
  %141 = vmatprep.subr.bf16.mxu0 0
  %142 = vmatpush1.bf16.msra.mxu0 0
  %143 = vmatprep.subr.bf16.mxu0 0
  %144 = vmatpush1.bf16.msra.mxu0 0
  %145 = vmatprep.subr.bf16.mxu0 0
  %146 = vmatpush1.bf16.msra.mxu0 0
  %147 = vmatprep.subr.bf16.mxu0 %v94
  %148 = vmatpush1.bf16.msra.mxu0 %v91
  %149 = vmatprep.subr.bf16.mxu0 %v66
  %150 = vmatpush1.bf16.msra.mxu0 %v65
  %151 = vmatprep.subr.bf16.mxu0 %v62
  %152 = vmatpush1.bf16.msra.mxu0 %v61
  %153 = vmatprep.subr.bf16.mxu0 0
  %154 = vmatpush2.bf16.msra.mxu0 0
  %155 = vmatprep.subr.bf16.mxu0 0
  %156 = vmatpush2.bf16.msra.mxu0 0
  %157 = vmatprep.subr.bf16.mxu0 0
  %158 = vmatpush2.bf16.msra.mxu0 0
  %159 = vmatprep.subr.bf16.mxu0 0
  %160 = vmatpush2.bf16.msra.mxu0 0
  %161 = vmatprep.subr.bf16.mxu0 0
  %162 = vmatpush2.bf16.msra.mxu0 0
  %163 = vmatprep.subr.bf16.mxu0 0
  %164 = vmatpush2.bf16.msra.mxu0 0
  %165 = vmatprep.subr.bf16.mxu0 0
  %166 = vmatpush2.bf16.msra.mxu0 0
  %167 = vmatprep.subr.bf16.mxu0 0
  %168 = vmatpush2.bf16.msra.mxu0 0
  %169 = vmatprep.mubr.bf16.mxu0 0
  %170 = vmatmul.mubr.bf16.gmra.mxu0 %v81
  %v171 = vpop.f32.mrf.mxu0
  %v172 = vadd.f32 0.0, %v171
  %v173 = vpop.f32.mrf.mxu0
  %v174 = vadd.f32 0.0, %v173
  %v175 = vpop.f32.mrf.mxu0
  %v176 = vpop.f32.mrf.mxu0
  %177 = vdwg.mxu0
  %v178 = vadd.f32 %v131, %v133
  %v179 = vadd.f32 %v178, %v172
  %v180 = vadd.f32 %v179, %v174
  %181 = vadd.xlane.f32.xlu0 %v180
  %v182 = vpop.xlane.xlu0 %181
  %v183 = vmul.f32 %v182, 0.001953125
  %v184 = vsub.f32 %v131, %v183
  %v185 = vsub.f32 %v133, %v183
  %v186 = vsub.f32 %v172, %v183
  %v187 = vsub.f32 %v174, %v183
  %v188 = vmul.f32 %v184, %v184
  %v189 = vmul.f32 %v185, %v185
  %v190 = vmul.f32 %v186, %v186
  %v191 = vmul.f32 %v187, %v187
  %v192 = vadd.f32 %v188, %v189
  %v193 = vadd.f32 %v192, %v190
  %v194 = vadd.f32 %v193, %v191
  %195 = vadd.xlane.f32.xlu0 %v194
  %v196 = vpop.xlane.xlu0 %195
  %v197 = vmul.f32 %v196, 0.001953125
  %v198 = vld [vmem:[%s2] sm:$0xff]
  %v199 = vadd.f32 %v197, 1e-05
  %v200 = vrsqrt.pop %v199
  %v201 = vmul.f32 %v198, %v200
  %203 = vset.pattern.permute.xlu0 0
  %204 = vperm.xlu0 %203, %v201
  %v205 = vpop.permute.xlu0 %204
  %v207 = vmul.f32 %v184, %v205
  %v208 = vmul.f32 %v185, %v205
  %v209 = vmul.f32 %v186, %v205
  %v210 = vmul.f32 %v187, %v205
  %v211 = vld [vmem:[%s3] sm:$0xff]
  %213 = vset.pattern.permute.xlu0 0
  %214 = vperm.xlu0 %213, %v211
  %v215 = vpop.permute.xlu0 %214
  %v217 = vadd.f32 %v207, %v215
  %v218 = vadd.f32 %v208, %v215
  %v219 = vadd.f32 %v209, %v215
  %v220 = vadd.f32 %v210, %v215
  %v221 = vmax.f32 %v217, 0.0
  %v222 = vmax.f32 %v218, 0.0
  %v223 = vmax.f32 %v219, 0.0
  %v224 = vmax.f32 %v220, 0.0
  %225 = vst [vmem:[%s4] sm:$0xff] %v221
  %226 = vst [vmem:[%s4 + $0x8] sm:$0xff] %v222
  %227 = vst [vmem:[%s4 + $0x10] sm:$0xff] %v223
  %228 = vst [vmem:[%s4 + $0x18] sm:$0xff] %v224
  // Predicated region
  $region18: #{dla_node_forward.1} parent=0 // pred_check
    _
  $region19: #{dla_node_forward.1} parent=0 // pred_check_branch
    %230 = sbr.rel (0) target = $region21
  $region20: #{dla_node_forward.1} parent=0 // pred_region
    _
  $region21: #{dla_node_forward.1} parent=0 // pred_fallthru
    _
  // Predicated region
  $region22: #{dla_node_forward.1} parent=0 // pred_check
    _
  $region23: #{dla_node_forward.1} parent=0 // pred_check_branch
    %232 = sbr.rel (0) target = $region25
  $region24: #{dla_node_forward.1} parent=0 // pred_region
    _
  $region25: #{dla_node_forward.1} parent=0 // pred_fallthru
    _

</llo_original>
